<compile_context>
chip_gen: v6e
topology: v6e:2x2x1
jax: 0.10.0
libtpu: 0.0.40
codegen_flags: <defaults>
</compile_context>

<pallas_src>
import functools

import jax
import jax.numpy as jnp
from jax.experimental import pallas as pl
from jax.experimental.pallas import tpu as pltpu


def _banded_conv_weights(weight, W, dtype=jnp.bfloat16):
    """OIHW 3x3 weights -> (3*W*C_in, W*C_out) wide banded matrix.

    Band kh occupies rows [kh*W*C_in, (kh+1)*W*C_in) and contracts the input
    spatial row at vertical offset kh - 1.  Entry
        [kh*W*Ci + wi*Ci + c, w*Co + o] = weight[o, c, kh, wi - w + 1]
    when (wi - w + 1) is in [0, 3), else 0 — this realizes padding=1 horizontally
    (out-of-range columns contribute zero, exactly like zero padding).
    """
    C_out, C_in, KH, KW = weight.shape
    assert KH == 3 and KW == 3, "banded construction assumes a 3x3 kernel"
    wi = jnp.arange(W)[:, None]                       # operand (packed) column index
    w = jnp.arange(W)[None, :]                        # output column index
    kw = wi - w + 1                                   # kernel column index
    valid = (kw >= 0) & (kw <= 2)
    kw_c = jnp.clip(kw, 0, 2)
    wt = jnp.transpose(weight, (2, 3, 1, 0))          # (3, 3, C_in, C_out) [kh,kw,ci,co]
    M = wt[:, kw_c] * valid[None, :, :, None, None].astype(weight.dtype)  # (3,W,W,Ci,Co)
    M = jnp.transpose(M, (0, 1, 3, 2, 4)).reshape(3 * W * C_in, W * C_out)
    return M.astype(dtype)


def _pick_batch_block(N, H, target_rows=256):
    """Largest divisor NB of N with NB*H <= target_rows (MXU M-dim fill).

    Note: on v7x (2 TensorCores) one may prefer NB <= N/2 so the grid keeps >= 2
    parallel steps; at large N that happens automatically, at tiny N the work is
    overhead-dominated either way.
    """
    nb = max(1, min(N, target_rows // max(H, 1)))
    while N % nb:
        nb -= 1
    return nb


def _fused_bottleneck_kernel(x_ref, we_ref, be_ref, wd_ref, bd_ref, o_ref,
                             xw_ref, zw_ref, *, H, W, C_in, C_mid, C_out, NB):
    """Fused encoder(conv3x3 + ReLU) -> decoder(conv3x3) for NB batch elements.

    Row ordering inside each batch element is parity-blocked:
      packed row p        (p in [0, H/2))  = spatial row 2p   ("even" block)
      packed row H/2 + p                    = spatial row 2p+1 ("odd" block)
    so every vertically shifted copy below is a contiguous slice, and the decoder
    output pairs (2p, 2p+1) pack directly into 2*W*C_out = lane-dense output rows.

    x_ref  : (NB, H, W*C_in)            parity-blocked, width/channel-packed input
    we_ref : (3*W*C_in, W*C_mid) bf16   encoder wide banded weights (K-folded)
    be_ref : (1, W*C_mid)               encoder bias tiled across width
    wd_ref : (3*W*C_mid, W*C_out) bf16  decoder wide banded weights
    bd_ref : (1, W*C_out)               decoder bias tiled across width
    o_ref  : (NB, H//2, 2*W*C_out)      pair-packed (lane-dense) output rows
    xw_ref : VMEM (NB*H, 3*W*C_in)      encoder wide operand scratch
    zw_ref : VMEM (NB*H, 3*W*C_mid)     decoder wide operand scratch (z stays in VMEM)
    """
    H2 = H // 2
    Ki = W * C_in
    Km = W * C_mid
    Ko = W * C_out

    xall = x_ref[...]                                   # (NB, H, Ki)
    zero_i = jnp.zeros((1, Ki), jnp.float32)            # hoisted (no per-iter broadcast)
    zero_m = jnp.zeros((1, Km), jnp.float32)

    # ---- build encoder wide operand: band kh holds spatial row r + kh - 1 ----
    for b in range(NB):
        base = b * H
        ev = xall[b, 0:H2]                               # even spatial rows 2p
        od = xall[b, H2:H]                               # odd  spatial rows 2p+1
        # only the two halo rows per element ever need zeroing (cheap, per step)
        xw_ref[base:base + 1, 0:Ki] = zero_i                       # top halo, band 0
        xw_ref[base + H - 1:base + H, 2 * Ki:3 * Ki] = zero_i      # bottom halo, band 2
        # even-output rows 2p use spatial rows (2p-1, 2p, 2p+1) = (od[p-1], ev[p], od[p])
        xw_ref[base + 1:base + H2, 0:Ki] = od[0:H2 - 1]
        xw_ref[base:base + H2, Ki:2 * Ki] = ev
        xw_ref[base:base + H2, 2 * Ki:3 * Ki] = od
        # odd-output rows 2p+1 use (2p, 2p+1, 2p+2) = (ev[p], od[p], ev[p+1])
        xw_ref[base + H2:base + H, 0:Ki] = ev
        xw_ref[base + H2:base + H, Ki:2 * Ki] = od
        xw_ref[base + H2:base + H - 1, 2 * Ki:3 * Ki] = ev[1:H2]

    # ---- encoder: one bf16 MXU matmul (K = 3*W*C_in), f32 accumulate, bias+ReLU on VPU
    z = jnp.dot(xw_ref[...].astype(jnp.bfloat16), we_ref[...],
                preferred_element_type=jnp.float32)
    z = jnp.maximum(z + be_ref[...], 0.0)                # (NB*H, Km), parity-blocked rows

    # ---- decoder wide operand built from z (never leaves VMEM/vregs) ----
    for b in range(NB):
        base = b * H
        ev = z[base:base + H2]
        od = z[base + H2:base + H]
        zw_ref[base:base + 1, 0:Km] = zero_m
        zw_ref[base + H - 1:base + H, 2 * Km:3 * Km] = zero_m
        zw_ref[base + 1:base + H2, 0:Km] = od[0:H2 - 1]
        zw_ref[base:base + H2, Km:2 * Km] = ev
        zw_ref[base:base + H2, 2 * Km:3 * Km] = od
        zw_ref[base + H2:base + H, 0:Km] = ev
        zw_ref[base + H2:base + H, Km:2 * Km] = od
        zw_ref[base + H2:base + H - 1, 2 * Km:3 * Km] = ev[1:H2]

    # ---- decoder: one bf16 MXU matmul (K = 3*W*C_mid) + bias ----
    y = jnp.dot(zw_ref[...].astype(jnp.bfloat16), wd_ref[...],
                preferred_element_type=jnp.float32) + bd_ref[...]   # (NB*H, Ko)

    # ---- lane-dense output: pack (even row, odd row) pairs into 2*Ko lanes ----
    for b in range(NB):
        base = b * H
        o_ref[b, :, 0:Ko] = y[base:base + H2].astype(o_ref.dtype)
        o_ref[b, :, Ko:2 * Ko] = y[base + H2:base + H].astype(o_ref.dtype)


class SimpleBottleneckPallas:
    """encoder -> (compressor) -> (decompressor) -> decoder, compressor/decompressor = None.

    With compressor/decompressor = None the eval path (encode -> decode) and the
    training path (encoder -> decoder) are identical; both are served by the fused kernel.
    """

    def __init__(self, enc_w, enc_b, dec_w, dec_b, W):
        self.W = W
        self.C_in = enc_w.shape[1]
        self.C_mid = enc_w.shape[0]
        self.C_out = dec_w.shape[0]
        # Precompute wide banded weight slabs (bf16, resident in VMEM via constant
        # index_map) and width-tiled biases (f32).
        self.we = _banded_conv_weights(enc_w, W)                       # (3*W*Ci, W*Cm)
        self.be = jnp.tile(enc_b, W).reshape(1, W * self.C_mid).astype(jnp.float32)
        self.wd = _banded_conv_weights(dec_w, W)                       # (3*W*Cm, W*Co)
        self.bd = jnp.tile(dec_b, W).reshape(1, W * self.C_out).astype(jnp.float32)
        # TODO(synk): compressor/decompressor (entropy coding) have no Pallas equivalent;
        # they are None in this instantiation, i.e. identity.
        self.compressor = None
        self.decompressor = None

    def forward(self, x_nchw):
        N, C_in, H, W = x_nchw.shape
        assert W == self.W and C_in == self.C_in and H % 2 == 0
        C_mid, C_out = self.C_mid, self.C_out
        H2 = H // 2
        NB = _pick_batch_block(N, H)

        # NCHW -> parity-blocked, width/channel-packed rows:
        #   x_packed[n, j*H2 + p, w*C + c] = x[n, c, 2p + j, w]
        # (single fused reshape/transpose/reshape on the wrapper side).
        x_packed = (x_nchw.reshape(N, C_in, H2, 2, W)
                    .transpose(0, 3, 2, 4, 1)
                    .reshape(N, H, W * C_in))

        kernel = functools.partial(_fused_bottleneck_kernel, H=H, W=W,
                                   C_in=C_in, C_mid=C_mid, C_out=C_out, NB=NB)

        out_packed = pl.pallas_call(
            kernel,
            out_shape=jax.ShapeDtypeStruct((N, H2, 2 * W * C_out), x_nchw.dtype),
            grid_spec=pltpu.PrefetchScalarGridSpec(
                num_scalar_prefetch=0,
                grid=(N // NB,),
                in_specs=[
                    pl.BlockSpec((NB, H, W * C_in), lambda n: (n, 0, 0)),
                    pl.BlockSpec((3 * W * C_in, W * C_mid), lambda n: (0, 0)),
                    pl.BlockSpec((1, W * C_mid), lambda n: (0, 0)),
                    pl.BlockSpec((3 * W * C_mid, W * C_out), lambda n: (0, 0)),
                    pl.BlockSpec((1, W * C_out), lambda n: (0, 0)),
                ],
                out_specs=pl.BlockSpec((NB, H2, 2 * W * C_out), lambda n: (n, 0, 0)),
                scratch_shapes=[
                    pltpu.VMEM((NB * H, 3 * W * C_in), jnp.float32),
                    pltpu.VMEM((NB * H, 3 * W * C_mid), jnp.float32),
                ],
            ),
            compiler_params=pltpu.CompilerParams(
                dimension_semantics=("parallel",)),
        )(x_packed, self.we, self.be, self.wd, self.bd)

        # Pair-packed rows -> NCHW to match the PyTorch contract.
        return (out_packed.reshape(N, H2, 2, W, C_out)
                .transpose(0, 4, 1, 2, 3)
                .reshape(N, C_out, H, W))


def _reference_forward(x_nchw, enc_w, enc_b, dec_w, dec_b, mxu_dtype=jnp.bfloat16):
    """Pure-JAX reference (lax conv in NCHW, PyTorch Conv2d semantics) using the same
    bf16-operand / f32-accumulate precision the kernel uses on the MXU."""
    def conv(x, w, b):
        y = jax.lax.conv_general_dilated(
            x.astype(mxu_dtype), w.astype(mxu_dtype),
            window_strides=(1, 1), padding=((1, 1), (1, 1)),
            dimension_numbers=('NCHW', 'OIHW', 'NCHW'),
            preferred_element_type=jnp.float32)
        return y + b[None, :, None, None]
    z = jnp.maximum(conv(x_nchw, enc_w, enc_b), 0.0)
    return conv(z, dec_w, dec_b)


if __name__ == "__main__":
    key = jax.random.PRNGKey(0)
    N, C_in, H, W = 2, 4, 16, 16
    C_bneck = 8

    k_x, k_ew, k_eb, k_dw, k_db = jax.random.split(key, 5)
    x = jax.random.normal(k_x, (N, C_in, H, W), dtype=jnp.float32)
    enc_w = 0.1 * jax.random.normal(k_ew, (C_bneck, C_in, 3, 3), dtype=jnp.float32)
    enc_b = 0.1 * jax.random.normal(k_eb, (C_bneck,), dtype=jnp.float32)
    dec_w = 0.1 * jax.random.normal(k_dw, (C_in, C_bneck, 3, 3), dtype=jnp.float32)
    dec_b = 0.1 * jax.random.normal(k_db, (C_in,), dtype=jnp.float32)

    model = SimpleBottleneckPallas(enc_w, enc_b, dec_w, dec_b, W=W)
    fwd = jax.jit(model.forward)
    out = jax.block_until_ready(fwd(x))

    ref = _reference_forward(x, enc_w, enc_b, dec_w, dec_b)
    assert out.shape == (N, C_in, H, W), out.shape
    max_err = float(jnp.abs(out - ref).max())
    # bf16 MXU operands (f32 accumulation) -> compare against the bf16-matched
    # reference; tolerance covers accumulation-order differences only.
    assert jnp.allclose(out, ref, atol=1e-2, rtol=1e-2), max_err

    print("KERNEL_OK")
</pallas_src>

<mosaic_0001>
module attributes {stable_mosaic.version = 11 : i64} {
  func.func @_fused_bottleneck_kernel(%arg0: i32, %arg1: memref<2x16x64xf32, #tpu.memory_space<vmem>>, %arg2: memref<192x128xbf16, #tpu.memory_space<vmem>>, %arg3: memref<1x128xf32, #tpu.memory_space<vmem>>, %arg4: memref<384x64xbf16, #tpu.memory_space<vmem>>, %arg5: memref<1x64xf32, #tpu.memory_space<vmem>>, %arg6: memref<2x8x128xf32, #tpu.memory_space<vmem>>, %arg7: memref<32x192xf32, #tpu.memory_space<vmem>>, %arg8: memref<32x384xf32, #tpu.memory_space<vmem>>) attributes {dimension_semantics = [#tpu.dimension_semantics<parallel>], iteration_bounds = array<i64: 1>, scalar_prefetch = 0 : i64, scratch_operands = 2 : i64, tpu.core_type = #tpu.core_type<tc>, window_params = [{transform_indices = @transform_0, window_bounds = array<i64: 2, 16, 64>}, {pipeline_mode = #tpu.pipeline_mode<synchronous>, transform_indices = @transform_1, window_bounds = array<i64: 192, 128>}, {pipeline_mode = #tpu.pipeline_mode<synchronous>, transform_indices = @transform_2, window_bounds = array<i64: 1, 128>}, {pipeline_mode = #tpu.pipeline_mode<synchronous>, transform_indices = @transform_3, window_bounds = array<i64: 384, 64>}, {pipeline_mode = #tpu.pipeline_mode<synchronous>, transform_indices = @transform_4, window_bounds = array<i64: 1, 64>}, {transform_indices = @transform_5, window_bounds = array<i64: 2, 8, 128>}]} {
    %c0 = arith.constant 0 : index
    %c0_0 = arith.constant 0 : index
    %c0_1 = arith.constant 0 : index
    %0 = vector.load %arg1[%c0, %c0_0, %c0_1] : memref<2x16x64xf32, #tpu.memory_space<vmem>>, vector<2x16x64xf32>
    %cst = arith.constant 0.000000e+00 : f32
    %1 = vector.broadcast %cst : f32 to vector<1x64xf32>
    %cst_2 = arith.constant 0.000000e+00 : f32
    %2 = vector.broadcast %cst_2 : f32 to vector<1x128xf32>
    %3 = vector.extract_strided_slice %0 {offsets = [0, 0, 0], sizes = [1, 8, 64], strides = [1, 1, 1]} : vector<2x16x64xf32> to vector<1x8x64xf32>
    %4 = vector.shape_cast %3 : vector<1x8x64xf32> to vector<8x64xf32>
    %5 = vector.extract_strided_slice %0 {offsets = [0, 8, 0], sizes = [1, 8, 64], strides = [1, 1, 1]} : vector<2x16x64xf32> to vector<1x8x64xf32>
    %6 = vector.shape_cast %5 : vector<1x8x64xf32> to vector<8x64xf32>
    %c0_3 = arith.constant 0 : index
    %c0_4 = arith.constant 0 : index
    %7 = vector.load %arg7[%c0_3, %c0_4] : memref<32x192xf32, #tpu.memory_space<vmem>>, vector<1x64xf32>
    tpu.vector_store %arg7[%c0_3, %c0_4], %1 {strides = array<i32>} : memref<32x192xf32, #tpu.memory_space<vmem>>, vector<1x64xf32>,
    %c15 = arith.constant 15 : index
    %c128 = arith.constant 128 : index
    %8 = vector.load %arg7[%c15, %c128] : memref<32x192xf32, #tpu.memory_space<vmem>>, vector<1x64xf32>
    tpu.vector_store %arg7[%c15, %c128], %1 {strides = array<i32>} : memref<32x192xf32, #tpu.memory_space<vmem>>, vector<1x64xf32>,
    %9 = vector.extract_strided_slice %6 {offsets = [0, 0], sizes = [7, 64], strides = [1, 1]} : vector<8x64xf32> to vector<7x64xf32>
    %c1 = arith.constant 1 : index
    %c0_5 = arith.constant 0 : index
    %10 = vector.load %arg7[%c1, %c0_5] : memref<32x192xf32, #tpu.memory_space<vmem>>, vector<7x64xf32>
    tpu.vector_store %arg7[%c1, %c0_5], %9 {strides = array<i32>} : memref<32x192xf32, #tpu.memory_space<vmem>>, vector<7x64xf32>,
    %c0_6 = arith.constant 0 : index
    %c64 = arith.constant 64 : index
    %11 = vector.load %arg7[%c0_6, %c64] : memref<32x192xf32, #tpu.memory_space<vmem>>, vector<8x64xf32>
    tpu.vector_store %arg7[%c0_6, %c64], %4 {strides = array<i32>} : memref<32x192xf32, #tpu.memory_space<vmem>>, vector<8x64xf32>,
    %c0_7 = arith.constant 0 : index
    %c128_8 = arith.constant 128 : index
    %12 = vector.load %arg7[%c0_7, %c128_8] : memref<32x192xf32, #tpu.memory_space<vmem>>, vector<8x64xf32>
    tpu.vector_store %arg7[%c0_7, %c128_8], %6 {strides = array<i32>} : memref<32x192xf32, #tpu.memory_space<vmem>>, vector<8x64xf32>,
    %c8 = arith.constant 8 : index
    %c0_9 = arith.constant 0 : index
    %13 = vector.load %arg7[%c8, %c0_9] : memref<32x192xf32, #tpu.memory_space<vmem>>, vector<8x64xf32>
    tpu.vector_store %arg7[%c8, %c0_9], %4 {strides = array<i32>} : memref<32x192xf32, #tpu.memory_space<vmem>>, vector<8x64xf32>,
    %c8_10 = arith.constant 8 : index
    %c64_11 = arith.constant 64 : index
    %14 = vector.load %arg7[%c8_10, %c64_11] : memref<32x192xf32, #tpu.memory_space<vmem>>, vector<8x64xf32>
    tpu.vector_store %arg7[%c8_10, %c64_11], %6 {strides = array<i32>} : memref<32x192xf32, #tpu.memory_space<vmem>>, vector<8x64xf32>,
    %15 = vector.extract_strided_slice %4 {offsets = [1, 0], sizes = [7, 64], strides = [1, 1]} : vector<8x64xf32> to vector<7x64xf32>
    %c8_12 = arith.constant 8 : index
    %c128_13 = arith.constant 128 : index
    %16 = vector.load %arg7[%c8_12, %c128_13] : memref<32x192xf32, #tpu.memory_space<vmem>>, vector<7x64xf32>
    tpu.vector_store %arg7[%c8_12, %c128_13], %15 {strides = array<i32>} : memref<32x192xf32, #tpu.memory_space<vmem>>, vector<7x64xf32>,
    %17 = vector.extract_strided_slice %0 {offsets = [1, 0, 0], sizes = [1, 8, 64], strides = [1, 1, 1]} : vector<2x16x64xf32> to vector<1x8x64xf32>
    %18 = vector.shape_cast %17 : vector<1x8x64xf32> to vector<8x64xf32>
    %19 = vector.extract_strided_slice %0 {offsets = [1, 8, 0], sizes = [1, 8, 64], strides = [1, 1, 1]} : vector<2x16x64xf32> to vector<1x8x64xf32>
    %20 = vector.shape_cast %19 : vector<1x8x64xf32> to vector<8x64xf32>
    %c16 = arith.constant 16 : index
    %c0_14 = arith.constant 0 : index
    %21 = vector.load %arg7[%c16, %c0_14] : memref<32x192xf32, #tpu.memory_space<vmem>>, vector<1x64xf32>
    tpu.vector_store %arg7[%c16, %c0_14], %1 {strides = array<i32>} : memref<32x192xf32, #tpu.memory_space<vmem>>, vector<1x64xf32>,
    %c31 = arith.constant 31 : index
    %c128_15 = arith.constant 128 : index
    %22 = vector.load %arg7[%c31, %c128_15] : memref<32x192xf32, #tpu.memory_space<vmem>>, vector<1x64xf32>
    tpu.vector_store %arg7[%c31, %c128_15], %1 {strides = array<i32>} : memref<32x192xf32, #tpu.memory_space<vmem>>, vector<1x64xf32>,
    %23 = vector.extract_strided_slice %20 {offsets = [0, 0], sizes = [7, 64], strides = [1, 1]} : vector<8x64xf32> to vector<7x64xf32>
    %c17 = arith.constant 17 : index
    %c0_16 = arith.constant 0 : index
    %24 = vector.load %arg7[%c17, %c0_16] : memref<32x192xf32, #tpu.memory_space<vmem>>, vector<7x64xf32>
    tpu.vector_store %arg7[%c17, %c0_16], %23 {strides = array<i32>} : memref<32x192xf32, #tpu.memory_space<vmem>>, vector<7x64xf32>,
    %c16_17 = arith.constant 16 : index
    %c64_18 = arith.constant 64 : index
    %25 = vector.load %arg7[%c16_17, %c64_18] : memref<32x192xf32, #tpu.memory_space<vmem>>, vector<8x64xf32>
    tpu.vector_store %arg7[%c16_17, %c64_18], %18 {strides = array<i32>} : memref<32x192xf32, #tpu.memory_space<vmem>>, vector<8x64xf32>,
    %c16_19 = arith.constant 16 : index
    %c128_20 = arith.constant 128 : index
    %26 = vector.load %arg7[%c16_19, %c128_20] : memref<32x192xf32, #tpu.memory_space<vmem>>, vector<8x64xf32>
    tpu.vector_store %arg7[%c16_19, %c128_20], %20 {strides = array<i32>} : memref<32x192xf32, #tpu.memory_space<vmem>>, vector<8x64xf32>,
    %c24 = arith.constant 24 : index
    %c0_21 = arith.constant 0 : index
    %27 = vector.load %arg7[%c24, %c0_21] : memref<32x192xf32, #tpu.memory_space<vmem>>, vector<8x64xf32>
    tpu.vector_store %arg7[%c24, %c0_21], %18 {strides = array<i32>} : memref<32x192xf32, #tpu.memory_space<vmem>>, vector<8x64xf32>,
    %c24_22 = arith.constant 24 : index
    %c64_23 = arith.constant 64 : index
    %28 = vector.load %arg7[%c24_22, %c64_23] : memref<32x192xf32, #tpu.memory_space<vmem>>, vector<8x64xf32>
    tpu.vector_store %arg7[%c24_22, %c64_23], %20 {strides = array<i32>} : memref<32x192xf32, #tpu.memory_space<vmem>>, vector<8x64xf32>,
    %29 = vector.extract_strided_slice %18 {offsets = [1, 0], sizes = [7, 64], strides = [1, 1]} : vector<8x64xf32> to vector<7x64xf32>
    %c24_24 = arith.constant 24 : index
    %c128_25 = arith.constant 128 : index
    %30 = vector.load %arg7[%c24_24, %c128_25] : memref<32x192xf32, #tpu.memory_space<vmem>>, vector<7x64xf32>
    tpu.vector_store %arg7[%c24_24, %c128_25], %29 {strides = array<i32>} : memref<32x192xf32, #tpu.memory_space<vmem>>, vector<7x64xf32>,
    %c0_26 = arith.constant 0 : index
    %c0_27 = arith.constant 0 : index
    %31 = vector.load %arg7[%c0_26, %c0_27] : memref<32x192xf32, #tpu.memory_space<vmem>>, vector<32x192xf32>
    %32 = arith.truncf %31 : vector<32x192xf32> to vector<32x192xbf16>
    %c0_28 = arith.constant 0 : index
    %c0_29 = arith.constant 0 : index
    %33 = vector.load %arg2[%c0_28, %c0_29] : memref<192x128xbf16, #tpu.memory_space<vmem>>, vector<192x128xbf16>
    %cst_30 = arith.constant dense<0.000000e+00> : vector<32x128xf32>
    %34 = tpu.matmul %32, %33, %cst_30 {dimension_numbers = #tpu.dot_dimension_numbers<[1], [0], [0], [1], [0, 0, 1, 1], [], []>} : vector<32x192xbf16>, vector<192x128xbf16>, vector<32x128xf32> -> vector<32x128xf32>
    %c0_31 = arith.constant 0 : index
    %c0_32 = arith.constant 0 : index
    %35 = vector.load %arg3[%c0_31, %c0_32] : memref<1x128xf32, #tpu.memory_space<vmem>>, vector<1x128xf32>
    %36 = vector.broadcast %35 : vector<1x128xf32> to vector<32x128xf32>
    %37 = arith.addf %34, %36 : vector<32x128xf32>
    %cst_33 = arith.constant 0.000000e+00 : f32
    %38 = vector.broadcast %cst_33 : f32 to vector<32x128xf32>
    %39 = arith.maximumf %37, %38 : vector<32x128xf32>
    %40 = vector.extract_strided_slice %39 {offsets = [0, 0], sizes = [8, 128], strides = [1, 1]} : vector<32x128xf32> to vector<8x128xf32>
    %41 = vector.extract_strided_slice %39 {offsets = [8, 0], sizes = [8, 128], strides = [1, 1]} : vector<32x128xf32> to vector<8x128xf32>
    %c0_34 = arith.constant 0 : index
    %c0_35 = arith.constant 0 : index
    %42 = vector.load %arg8[%c0_34, %c0_35] : memref<32x384xf32, #tpu.memory_space<vmem>>, vector<1x128xf32>
    tpu.vector_store %arg8[%c0_34, %c0_35], %2 {strides = array<i32>} : memref<32x384xf32, #tpu.memory_space<vmem>>, vector<1x128xf32>,
    %c15_36 = arith.constant 15 : index
    %c256 = arith.constant 256 : index
    %43 = vector.load %arg8[%c15_36, %c256] : memref<32x384xf32, #tpu.memory_space<vmem>>, vector<1x128xf32>
    tpu.vector_store %arg8[%c15_36, %c256], %2 {strides = array<i32>} : memref<32x384xf32, #tpu.memory_space<vmem>>, vector<1x128xf32>,
    %44 = vector.extract_strided_slice %41 {offsets = [0, 0], sizes = [7, 128], strides = [1, 1]} : vector<8x128xf32> to vector<7x128xf32>
    %c1_37 = arith.constant 1 : index
    %c0_38 = arith.constant 0 : index
    %45 = vector.load %arg8[%c1_37, %c0_38] : memref<32x384xf32, #tpu.memory_space<vmem>>, vector<7x128xf32>
    tpu.vector_store %arg8[%c1_37, %c0_38], %44 {strides = array<i32>} : memref<32x384xf32, #tpu.memory_space<vmem>>, vector<7x128xf32>,
    %c0_39 = arith.constant 0 : index
    %c128_40 = arith.constant 128 : index
    %46 = vector.load %arg8[%c0_39, %c128_40] : memref<32x384xf32, #tpu.memory_space<vmem>>, vector<8x128xf32>
    tpu.vector_store %arg8[%c0_39, %c128_40], %40 {strides = array<i32>} : memref<32x384xf32, #tpu.memory_space<vmem>>, vector<8x128xf32>,
    %c0_41 = arith.constant 0 : index
    %c256_42 = arith.constant 256 : index
    %47 = vector.load %arg8[%c0_41, %c256_42] : memref<32x384xf32, #tpu.memory_space<vmem>>, vector<8x128xf32>
    tpu.vector_store %arg8[%c0_41, %c256_42], %41 {strides = array<i32>} : memref<32x384xf32, #tpu.memory_space<vmem>>, vector<8x128xf32>,
    %c8_43 = arith.constant 8 : index
    %c0_44 = arith.constant 0 : index
    %48 = vector.load %arg8[%c8_43, %c0_44] : memref<32x384xf32, #tpu.memory_space<vmem>>, vector<8x128xf32>
    tpu.vector_store %arg8[%c8_43, %c0_44], %40 {strides = array<i32>} : memref<32x384xf32, #tpu.memory_space<vmem>>, vector<8x128xf32>,
    %c8_45 = arith.constant 8 : index
    %c128_46 = arith.constant 128 : index
    %49 = vector.load %arg8[%c8_45, %c128_46] : memref<32x384xf32, #tpu.memory_space<vmem>>, vector<8x128xf32>
    tpu.vector_store %arg8[%c8_45, %c128_46], %41 {strides = array<i32>} : memref<32x384xf32, #tpu.memory_space<vmem>>, vector<8x128xf32>,
    %50 = vector.extract_strided_slice %40 {offsets = [1, 0], sizes = [7, 128], strides = [1, 1]} : vector<8x128xf32> to vector<7x128xf32>
    %c8_47 = arith.constant 8 : index
    %c256_48 = arith.constant 256 : index
    %51 = vector.load %arg8[%c8_47, %c256_48] : memref<32x384xf32, #tpu.memory_space<vmem>>, vector<7x128xf32>
    tpu.vector_store %arg8[%c8_47, %c256_48], %50 {strides = array<i32>} : memref<32x384xf32, #tpu.memory_space<vmem>>, vector<7x128xf32>,
    %52 = vector.extract_strided_slice %39 {offsets = [16, 0], sizes = [8, 128], strides = [1, 1]} : vector<32x128xf32> to vector<8x128xf32>
    %53 = vector.extract_strided_slice %39 {offsets = [24, 0], sizes = [8, 128], strides = [1, 1]} : vector<32x128xf32> to vector<8x128xf32>
    %c16_49 = arith.constant 16 : index
    %c0_50 = arith.constant 0 : index
    %54 = vector.load %arg8[%c16_49, %c0_50] : memref<32x384xf32, #tpu.memory_space<vmem>>, vector<1x128xf32>
    tpu.vector_store %arg8[%c16_49, %c0_50], %2 {strides = array<i32>} : memref<32x384xf32, #tpu.memory_space<vmem>>, vector<1x128xf32>,
    %c31_51 = arith.constant 31 : index
    %c256_52 = arith.constant 256 : index
    %55 = vector.load %arg8[%c31_51, %c256_52] : memref<32x384xf32, #tpu.memory_space<vmem>>, vector<1x128xf32>
    tpu.vector_store %arg8[%c31_51, %c256_52], %2 {strides = array<i32>} : memref<32x384xf32, #tpu.memory_space<vmem>>, vector<1x128xf32>,
    %56 = vector.extract_strided_slice %53 {offsets = [0, 0], sizes = [7, 128], strides = [1, 1]} : vector<8x128xf32> to vector<7x128xf32>
    %c17_53 = arith.constant 17 : index
    %c0_54 = arith.constant 0 : index
    %57 = vector.load %arg8[%c17_53, %c0_54] : memref<32x384xf32, #tpu.memory_space<vmem>>, vector<7x128xf32>
    tpu.vector_store %arg8[%c17_53, %c0_54], %56 {strides = array<i32>} : memref<32x384xf32, #tpu.memory_space<vmem>>, vector<7x128xf32>,
    %c16_55 = arith.constant 16 : index
    %c128_56 = arith.constant 128 : index
    %58 = vector.load %arg8[%c16_55, %c128_56] : memref<32x384xf32, #tpu.memory_space<vmem>>, vector<8x128xf32>
    tpu.vector_store %arg8[%c16_55, %c128_56], %52 {strides = array<i32>} : memref<32x384xf32, #tpu.memory_space<vmem>>, vector<8x128xf32>,
    %c16_57 = arith.constant 16 : index
    %c256_58 = arith.constant 256 : index
    %59 = vector.load %arg8[%c16_57, %c256_58] : memref<32x384xf32, #tpu.memory_space<vmem>>, vector<8x128xf32>
    tpu.vector_store %arg8[%c16_57, %c256_58], %53 {strides = array<i32>} : memref<32x384xf32, #tpu.memory_space<vmem>>, vector<8x128xf32>,
    %c24_59 = arith.constant 24 : index
    %c0_60 = arith.constant 0 : index
    %60 = vector.load %arg8[%c24_59, %c0_60] : memref<32x384xf32, #tpu.memory_space<vmem>>, vector<8x128xf32>
    tpu.vector_store %arg8[%c24_59, %c0_60], %52 {strides = array<i32>} : memref<32x384xf32, #tpu.memory_space<vmem>>, vector<8x128xf32>,
    %c24_61 = arith.constant 24 : index
    %c128_62 = arith.constant 128 : index
    %61 = vector.load %arg8[%c24_61, %c128_62] : memref<32x384xf32, #tpu.memory_space<vmem>>, vector<8x128xf32>
    tpu.vector_store %arg8[%c24_61, %c128_62], %53 {strides = array<i32>} : memref<32x384xf32, #tpu.memory_space<vmem>>, vector<8x128xf32>,
    %62 = vector.extract_strided_slice %52 {offsets = [1, 0], sizes = [7, 128], strides = [1, 1]} : vector<8x128xf32> to vector<7x128xf32>
    %c24_63 = arith.constant 24 : index
    %c256_64 = arith.constant 256 : index
    %63 = vector.load %arg8[%c24_63, %c256_64] : memref<32x384xf32, #tpu.memory_space<vmem>>, vector<7x128xf32>
    tpu.vector_store %arg8[%c24_63, %c256_64], %62 {strides = array<i32>} : memref<32x384xf32, #tpu.memory_space<vmem>>, vector<7x128xf32>,
    %c0_65 = arith.constant 0 : index
    %c0_66 = arith.constant 0 : index
    %64 = vector.load %arg8[%c0_65, %c0_66] : memref<32x384xf32, #tpu.memory_space<vmem>>, vector<32x384xf32>
    %65 = arith.truncf %64 : vector<32x384xf32> to vector<32x384xbf16>
    %c0_67 = arith.constant 0 : index
    %c0_68 = arith.constant 0 : index
    %66 = vector.load %arg4[%c0_67, %c0_68] : memref<384x64xbf16, #tpu.memory_space<vmem>>, vector<384x64xbf16>
    %cst_69 = arith.constant dense<0.000000e+00> : vector<32x64xf32>
    %67 = tpu.matmul %65, %66, %cst_69 {dimension_numbers = #tpu.dot_dimension_numbers<[1], [0], [0], [1], [0, 0, 1, 1], [], []>} : vector<32x384xbf16>, vector<384x64xbf16>, vector<32x64xf32> -> vector<32x64xf32>
    %c0_70 = arith.constant 0 : index
    %c0_71 = arith.constant 0 : index
    %68 = vector.load %arg5[%c0_70, %c0_71] : memref<1x64xf32, #tpu.memory_space<vmem>>, vector<1x64xf32>
    %69 = vector.broadcast %68 : vector<1x64xf32> to vector<32x64xf32>
    %70 = arith.addf %67, %69 : vector<32x64xf32>
    %71 = vector.extract_strided_slice %70 {offsets = [0, 0], sizes = [8, 64], strides = [1, 1]} : vector<32x64xf32> to vector<8x64xf32>
    %c0_72 = arith.constant 0 : index
    %c0_73 = arith.constant 0 : index
    %c0_74 = arith.constant 0 : index
    %72 = vector.load %arg6[%c0_72, %c0_73, %c0_74] : memref<2x8x128xf32, #tpu.memory_space<vmem>>, vector<1x8x64xf32>
    %73 = vector.shape_cast %72 : vector<1x8x64xf32> to vector<8x64xf32>
    %74 = vector.shape_cast %71 : vector<8x64xf32> to vector<1x8x64xf32>
    tpu.vector_store %arg6[%c0_72, %c0_73, %c0_74], %74 {strides = array<i32>} : memref<2x8x128xf32, #tpu.memory_space<vmem>>, vector<1x8x64xf32>,
    %75 = vector.extract_strided_slice %70 {offsets = [8, 0], sizes = [8, 64], strides = [1, 1]} : vector<32x64xf32> to vector<8x64xf32>
    %c0_75 = arith.constant 0 : index
    %c0_76 = arith.constant 0 : index
    %c64_77 = arith.constant 64 : index
    %76 = vector.load %arg6[%c0_75, %c0_76, %c64_77] : memref<2x8x128xf32, #tpu.memory_space<vmem>>, vector<1x8x64xf32>
    %77 = vector.shape_cast %76 : vector<1x8x64xf32> to vector<8x64xf32>
    %78 = vector.shape_cast %75 : vector<8x64xf32> to vector<1x8x64xf32>
    tpu.vector_store %arg6[%c0_75, %c0_76, %c64_77], %78 {strides = array<i32>} : memref<2x8x128xf32, #tpu.memory_space<vmem>>, vector<1x8x64xf32>,
    %79 = vector.extract_strided_slice %70 {offsets = [16, 0], sizes = [8, 64], strides = [1, 1]} : vector<32x64xf32> to vector<8x64xf32>
    %c1_78 = arith.constant 1 : index
    %c0_79 = arith.constant 0 : index
    %c0_80 = arith.constant 0 : index
    %80 = vector.load %arg6[%c1_78, %c0_79, %c0_80] : memref<2x8x128xf32, #tpu.memory_space<vmem>>, vector<1x8x64xf32>
    %81 = vector.shape_cast %80 : vector<1x8x64xf32> to vector<8x64xf32>
    %82 = vector.shape_cast %79 : vector<8x64xf32> to vector<1x8x64xf32>
    tpu.vector_store %arg6[%c1_78, %c0_79, %c0_80], %82 {strides = array<i32>} : memref<2x8x128xf32, #tpu.memory_space<vmem>>, vector<1x8x64xf32>,
    %83 = vector.extract_strided_slice %70 {offsets = [24, 0], sizes = [8, 64], strides = [1, 1]} : vector<32x64xf32> to vector<8x64xf32>
    %c1_81 = arith.constant 1 : index
    %c0_82 = arith.constant 0 : index
    %c64_83 = arith.constant 64 : index
    %84 = vector.load %arg6[%c1_81, %c0_82, %c64_83] : memref<2x8x128xf32, #tpu.memory_space<vmem>>, vector<1x8x64xf32>
    %85 = vector.shape_cast %84 : vector<1x8x64xf32> to vector<8x64xf32>
    %86 = vector.shape_cast %83 : vector<8x64xf32> to vector<1x8x64xf32>
    tpu.vector_store %arg6[%c1_81, %c0_82, %c64_83], %86 {strides = array<i32>} : memref<2x8x128xf32, #tpu.memory_space<vmem>>, vector<1x8x64xf32>,
    return
  }
  func.func @transform_0(%arg0: i32) -> (i32, i32, i32) {
    %c0_i32 = arith.constant 0 : i32
    %c0_i32_0 = arith.constant 0 : i32
    %c0_i32_1 = arith.constant 0 : i32
    return %arg0, %c0_i32, %c0_i32_0 : i32, i32, i32
  }
  func.func @transform_1(%arg0: i32) -> (i32, i32) {
    %c0_i32 = arith.constant 0 : i32
    %c0_i32_0 = arith.constant 0 : i32
    %c0_i32_1 = arith.constant 0 : i32
    return %c0_i32, %c0_i32_0 : i32, i32
  }
  func.func @transform_2(%arg0: i32) -> (i32, i32) {
    %c0_i32 = arith.constant 0 : i32
    %c0_i32_0 = arith.constant 0 : i32
    %c0_i32_1 = arith.constant 0 : i32
    return %c0_i32, %c0_i32_0 : i32, i32
  }
  func.func @transform_3(%arg0: i32) -> (i32, i32) {
    %c0_i32 = arith.constant 0 : i32
    %c0_i32_0 = arith.constant 0 : i32
    %c0_i32_1 = arith.constant 0 : i32
    return %c0_i32, %c0_i32_0 : i32, i32
  }
  func.func @transform_4(%arg0: i32) -> (i32, i32) {
    %c0_i32 = arith.constant 0 : i32
    %c0_i32_0 = arith.constant 0 : i32
    %c0_i32_1 = arith.constant 0 : i32
    return %c0_i32, %c0_i32_0 : i32, i32
  }
  func.func @transform_5(%arg0: i32) -> (i32, i32, i32) {
    %c0_i32 = arith.constant 0 : i32
    %c0_i32_0 = arith.constant 0 : i32
    %c0_i32_1 = arith.constant 0 : i32
    return %arg0, %c0_i32, %c0_i32_0 : i32, i32, i32
  }
}

</mosaic_0001>

<llo_original>
// kernel: forward.1
$region0: #{forward.1}
  #allocation0 [shape = 'u32[]', space=smem, size = 0x4, offset = 0x4, fixed_abs, tag = 'smem constant byte address 0x4 - core index']
  #allocation1 [shape = 'u32[144,128]{1,0:T(1,128)}', space=vmem, size = 0x12000, scoped, tag = 'internal scratch']
  #allocation2 [shape = 'f32[32,192]{1,0:T(8,128)}', space=vmem, size = 0x8000, scoped, tag = 'scratch operand']
  #allocation3 [shape = 'f32[32,384]{1,0:T(8,128)}', space=vmem, size = 0xc000, scoped, tag = 'scratch operand']
  %s0 = inlined_call_operand.vmem [shape: f32[2,16,64], index: 0, kind: input, shape index: {}]
  %s1 = inlined_call_operand.vmem [shape: bf16[192,128], index: 1, kind: input, shape index: {}]
  %s2 = inlined_call_operand.vmem [shape: f32[1,128], index: 2, kind: input, shape index: {}]
  %s3 = inlined_call_operand.vmem [shape: bf16[384,64], index: 3, kind: input, shape index: {}]
  %s4 = inlined_call_operand.vmem [shape: f32[1,64], index: 4, kind: input, shape index: {}]
  %s5 = inlined_call_operand.vmem [shape: f32[2,8,128], index: 5, kind: output, shape index: {}]
  %s6 = sld [smem:[#allocation0]]
  $region30: #{forward.1} parent=0
    _
  %s8 = ssub.s32 1, %s6
  %s9 = scalar_select 0, %s8, %s6
  // Predicated region
  $region2: #{forward.1} parent=0 // pred_check
    _
  $region3: #{forward.1} parent=0 // pred_check_branch
    %11 = sbr.rel (0) target = $region5
  $region4: #{forward.1} parent=0 // pred_region
    _
  $region5: #{forward.1} parent=0 // pred_fallthru
    _
  // Predicated region
  $region6: #{forward.1} parent=0 // pred_check
    _
  $region7: #{forward.1} parent=0 // pred_check_branch
    %13 = sbr.rel (0) target = $region9
  $region8: #{forward.1} parent=0 // pred_region
    _
  $region9: #{forward.1} parent=0 // pred_fallthru
    _
  // Predicated region
  $region10: #{forward.1} parent=0 // pred_check
    _
  $region11: #{forward.1} parent=0 // pred_check_branch
    %15 = sbr.rel (0) target = $region13
  $region12: #{forward.1} parent=0 // pred_region
    _
  $region13: #{forward.1} parent=0 // pred_fallthru
    _
  // Predicated region
  $region14: #{forward.1} parent=0 // pred_check
    _
  $region15: #{forward.1} parent=0 // pred_check_branch
    %17 = sbr.rel (0) target = $region17
  $region16: #{forward.1} parent=0 // pred_region
    _
  $region17: #{forward.1} parent=0 // pred_fallthru
    _
  // Predicated region
  $region18: #{forward.1} parent=0 // pred_check
    _
  $region19: #{forward.1} parent=0 // pred_check_branch
    %19 = sbr.rel (0) target = $region21
  $region20: #{forward.1} parent=0 // pred_region
    _
  $region21: #{forward.1} parent=0 // pred_fallthru
    _
  %v21 = vld [vmem:[%s0] sm:$0xff]
  %v22 = vld [vmem:[%s0 + $0x8] sm:$0xff]
  %v23 = vld [vmem:[%s0 + $0x10] sm:$0xff]
  %v24 = vld [vmem:[%s0 + $0x18] sm:$0xff]
  %vm25 = vcmask 516096
  %26 = vst.msk [vmem:[#allocation2] sm:$0x1] %vm25, 0.0
  %27 = vst.msk [vmem:[#allocation2 + $0x1f] sm:$0x1] %vm25, 0.0
  %v29 = vrot.slane %v22, 7
  %vm31 = vcmask 523265
  %32 = vst.msk [vmem:[#allocation2] sm:$0xfe] %vm31, %v29
  %34 = vrot.lane.b32.xlu0 %v21, 64
  %v35 = vpop.permute.xlu0 %34
  %vm37 = vcmask 1048064
  %38 = vst.msk [vmem:[#allocation2] sm:$0xff] %vm37, %v35
  %vm39 = vcmask 523264
  %40 = vst.msk [vmem:[#allocation2 + $0x8] sm:$0xff] %vm39, %v22
  %41 = vst.msk [vmem:[#allocation2 + $0x10] sm:$0xff] %vm39, %v21
  %42 = vrot.lane.b32.xlu0 %v22, 64
  %v43 = vpop.permute.xlu0 %42
  %45 = vst.msk [vmem:[#allocation2 + $0x10] sm:$0xff] %vm37, %v43
  %v46 = vrot.slane %v21, 1
  %vm48 = vcmask 522240
  %49 = vst.msk [vmem:[#allocation2 + $0x18] sm:$0x7f] %vm48, %v46
  %50 = vst.msk [vmem:[#allocation2 + $0x20] sm:$0x1] %vm25, 0.0
  %51 = vst.msk [vmem:[#allocation2 + $0x3f] sm:$0x1] %vm25, 0.0
  %v53 = vrot.slane %v24, 7
  %55 = vst.msk [vmem:[#allocation2 + $0x20] sm:$0xfe] %vm31, %v53
  %57 = vrot.lane.b32.xlu0 %v23, 64
  %v58 = vpop.permute.xlu0 %57
  %60 = vst.msk [vmem:[#allocation2 + $0x20] sm:$0xff] %vm37, %v58
  %61 = vst.msk [vmem:[#allocation2 + $0x28] sm:$0xff] %vm39, %v24
  %62 = vst.msk [vmem:[#allocation2 + $0x30] sm:$0xff] %vm39, %v23
  %63 = vrot.lane.b32.xlu0 %v24, 64
  %v64 = vpop.permute.xlu0 %63
  %66 = vst.msk [vmem:[#allocation2 + $0x30] sm:$0xff] %vm37, %v64
  %v67 = vrot.slane %v23, 1
  %69 = vst.msk [vmem:[#allocation2 + $0x38] sm:$0x7f] %vm48, %v67
  %v70 = vld [vmem:[#allocation2] sm:$0xff]
  %v71 = vld [vmem:[#allocation2 + $0x8] sm:$0xff]
  %v72 = vld [vmem:[#allocation2 + $0x10] sm:$0xff]
  %v73 = vld [vmem:[#allocation2 + $0x18] sm:$0xff]
  %v74 = vld [vmem:[#allocation2 + $0x20] sm:$0xff]
  %v75 = vld [vmem:[#allocation2 + $0x28] sm:$0xff]
  %v76 = vld [vmem:[#allocation2 + $0x30] sm:$0xff]
  %v77 = vld [vmem:[#allocation2 + $0x38] sm:$0xff]
  %v78 = vpack.c.bf16 %v72, %v70
  %v79 = vpack.c.bf16 %v73, %v71
  %v80 = vpack.c.bf16 %v76, %v74
  %v81 = vpack.c.bf16 %v77, %v75
  %v82 = vld [vmem:[%s1] sm:$0xf]
  %v83 = vld [vmem:[%s1 + $0x4] sm:$0xf]
  %v84 = vld [vmem:[%s1 + $0x8] sm:$0xf]
  %v85 = vld [vmem:[%s1 + $0xc] sm:$0xf]
  %v86 = vld [vmem:[%s1 + $0x10] sm:$0xf]
  %v87 = vld [vmem:[%s1 + $0x14] sm:$0xf]
  %v88 = vld [vmem:[%s1 + $0x18] sm:$0xf]
  %v89 = vld [vmem:[%s1 + $0x1c] sm:$0xf]
  %v90 = vld [vmem:[%s1 + $0x20] sm:$0xf]
  %v91 = vld [vmem:[%s1 + $0x24] sm:$0xf]
  %v92 = vld [vmem:[%s1 + $0x28] sm:$0xf]
  %v93 = vld [vmem:[%s1 + $0x2c] sm:$0xf]
  %v94 = vld [vmem:[%s1 + $0x30] sm:$0xf]
  %v95 = vld [vmem:[%s1 + $0x34] sm:$0xf]
  %v96 = vld [vmem:[%s1 + $0x38] sm:$0xf]
  %v97 = vld [vmem:[%s1 + $0x3c] sm:$0xf]
  %v98 = vld [vmem:[%s1 + $0x40] sm:$0xf]
  %v99 = vld [vmem:[%s1 + $0x44] sm:$0xf]
  %v100 = vld [vmem:[%s1 + $0x48] sm:$0xf]
  %v101 = vld [vmem:[%s1 + $0x4c] sm:$0xf]
  %v102 = vld [vmem:[%s1 + $0x50] sm:$0xf]
  %v103 = vld [vmem:[%s1 + $0x54] sm:$0xf]
  %v104 = vld [vmem:[%s1 + $0x58] sm:$0xf]
  %v105 = vld [vmem:[%s1 + $0x5c] sm:$0xf]
  %v106 = vld [vmem:[%s2] sm:$0x1]
  %v108 = vlaneseq
  %v109 = vshrl.u32 %v108, 7
  %v110 = vsub.s32 0, %v109
  %v111 = vrot.slane %v106, %v110
  %v137 = vunpack.c.l.b16 %v82
  %v138 = vunpack.c.l.b16 %v83
  %v139 = vunpack.c.l.b16 %v84
  %v140 = vunpack.c.l.b16 %v85
  %v141 = vunpack.c.l.b16 %v86
  %v142 = vunpack.c.l.b16 %v87
  %v143 = vunpack.c.l.b16 %v88
  %v144 = vunpack.c.l.b16 %v89
  %v145 = vunpack.c.l.b16 %v90
  %v146 = vunpack.c.l.b16 %v91
  %v147 = vunpack.c.l.b16 %v92
  %v148 = vunpack.c.l.b16 %v93
  %v149 = vunpack.c.l.b16 %v94
  %v150 = vunpack.c.l.b16 %v95
  %v151 = vunpack.c.l.b16 %v96
  %v152 = vunpack.c.l.b16 %v97
  %v153 = vunpack.c.l.b16 %v98
  %v154 = vunpack.c.l.b16 %v99
  %v155 = vunpack.c.l.b16 %v100
  %v156 = vunpack.c.l.b16 %v101
  %v157 = vunpack.c.l.b16 %v102
  %v158 = vunpack.c.l.b16 %v103
  %v159 = vunpack.c.l.b16 %v104
  %v160 = vunpack.c.l.b16 %v105
  %v161 = vpack.c.b16 %v138, %v137
  %v162 = vpack.c.b16 %v140, %v139
  %v163 = vpack.c.b16 %v142, %v141
  %v164 = vpack.c.b16 %v144, %v143
  %v165 = vpack.c.b16 %v146, %v145
  %v166 = vpack.c.b16 %v148, %v147
  %v167 = vpack.c.b16 %v150, %v149
  %v168 = vpack.c.b16 %v152, %v151
  %v169 = vpack.c.b16 %v154, %v153
  %v170 = vpack.c.b16 %v156, %v155
  %v171 = vpack.c.b16 %v158, %v157
  %v172 = vpack.c.b16 %v160, %v159
  %v186 = vsel %vm39, %v79, 0
  %v189 = vsel %vm39, %v81, 0
  %191 = vmatprep.subr.bf16.mxu0 0
  %192 = vmatpush1.bf16.msra.mxu0 %v168
  %193 = vmatprep.subr.bf16.mxu0 0
  %194 = vmatpush1.bf16.msra.mxu0 %v167
  %195 = vmatprep.subr.bf16.mxu0 0
  %196 = vmatpush1.bf16.msra.mxu0 %v166
  %197 = vmatprep.subr.bf16.mxu0 0
  %198 = vmatpush1.bf16.msra.mxu0 %v165
  %199 = vmatprep.subr.bf16.mxu0 0
  %200 = vmatpush1.bf16.msra.mxu0 %v164
  %201 = vmatprep.subr.bf16.mxu0 0
  %202 = vmatpush1.bf16.msra.mxu0 %v163
  %203 = vmatprep.subr.bf16.mxu0 0
  %204 = vmatpush1.bf16.msra.mxu0 %v162
  %205 = vmatprep.subr.bf16.mxu0 0
  %206 = vmatpush1.bf16.msra.mxu0 %v161
  %207 = vmatprep.subr.bf16.mxu0 0
  %208 = vmatpush2.bf16.msra.mxu0 0
  %209 = vmatprep.subr.bf16.mxu0 0
  %210 = vmatpush2.bf16.msra.mxu0 0
  %211 = vmatprep.subr.bf16.mxu0 0
  %212 = vmatpush2.bf16.msra.mxu0 0
  %213 = vmatprep.subr.bf16.mxu0 0
  %214 = vmatpush2.bf16.msra.mxu0 0
  %215 = vmatprep.subr.bf16.mxu0 0
  %216 = vmatpush2.bf16.msra.mxu0 %v172
  %217 = vmatprep.subr.bf16.mxu0 0
  %218 = vmatpush2.bf16.msra.mxu0 %v171
  %219 = vmatprep.subr.bf16.mxu0 0
  %220 = vmatpush2.bf16.msra.mxu0 %v170
  %221 = vmatprep.subr.bf16.mxu0 0
  %222 = vmatpush2.bf16.msra.mxu0 %v169
  %223 = vmatprep.mubr.bf16.mxu0 %v186
  %224 = vmatmul.mubr.bf16.gmra.mxu0 %v78
  %v225 = vpop.f32.mrf.mxu0
  %v226 = vadd.f32 %v111, %v225
  %v227 = vpop.f32.mrf.mxu0
  %v228 = vpop.f32.mrf.mxu0
  %v229 = vadd.f32 %v111, %v228
  %v230 = vpop.f32.mrf.mxu0
  %231 = vmatprep.mubr.bf16.mxu0 %v189
  %232 = vmatmul.mubr.bf16.gmra.mxu0 %v80
  %v233 = vpop.f32.mrf.mxu0
  %v234 = vadd.f32 %v111, %v233
  %v235 = vpop.f32.mrf.mxu0
  %v236 = vpop.f32.mrf.mxu0
  %v237 = vadd.f32 %v111, %v236
  %v238 = vpop.f32.mrf.mxu0
  %239 = vdwg.mxu0
  %v240 = vmax.f32 %v226, 0.0
  %v241 = vmax.f32 %v229, 0.0
  %v242 = vmax.f32 %v234, 0.0
  %v243 = vmax.f32 %v237, 0.0
  %244 = vst [vmem:[#allocation3] sm:$0x1] 0.0
  %245 = vst [vmem:[#allocation3 + $0x2f] sm:$0x1] 0.0
  %v247 = vrot.slane %v241, 7
  %249 = vst [vmem:[#allocation3] sm:$0xfe] %v247
  %250 = vst [vmem:[#allocation3 + $0x8] sm:$0xff] %v240
  %251 = vst [vmem:[#allocation3 + $0x10] sm:$0xff] %v241
  %252 = vst [vmem:[#allocation3 + $0x18] sm:$0xff] %v240
  %253 = vst [vmem:[#allocation3 + $0x20] sm:$0xff] %v241
  %v255 = vrot.slane %v240, 1
  %257 = vst [vmem:[#allocation3 + $0x28] sm:$0x7f] %v255
  %258 = vst [vmem:[#allocation3 + $0x30] sm:$0x1] 0.0
  %259 = vst [vmem:[#allocation3 + $0x5f] sm:$0x1] 0.0
  %v261 = vrot.slane %v243, 7
  %263 = vst [vmem:[#allocation3 + $0x30] sm:$0xfe] %v261
  %264 = vst [vmem:[#allocation3 + $0x38] sm:$0xff] %v242
  %265 = vst [vmem:[#allocation3 + $0x40] sm:$0xff] %v243
  %266 = vst [vmem:[#allocation3 + $0x48] sm:$0xff] %v242
  %267 = vst [vmem:[#allocation3 + $0x50] sm:$0xff] %v243
  %v269 = vrot.slane %v242, 1
  %271 = vst [vmem:[#allocation3 + $0x58] sm:$0x7f] %v269
  %v272 = vld [vmem:[#allocation3] sm:$0xff]
  %v273 = vld [vmem:[#allocation3 + $0x8] sm:$0xff]
  %v274 = vld [vmem:[#allocation3 + $0x10] sm:$0xff]
  %v275 = vld [vmem:[#allocation3 + $0x18] sm:$0xff]
  %v276 = vld [vmem:[#allocation3 + $0x20] sm:$0xff]
  %v277 = vld [vmem:[#allocation3 + $0x28] sm:$0xff]
  %v278 = vld [vmem:[#allocation3 + $0x30] sm:$0xff]
  %v279 = vld [vmem:[#allocation3 + $0x38] sm:$0xff]
  %v280 = vld [vmem:[#allocation3 + $0x40] sm:$0xff]
  %v281 = vld [vmem:[#allocation3 + $0x48] sm:$0xff]
  %v282 = vld [vmem:[#allocation3 + $0x50] sm:$0xff]
  %v283 = vld [vmem:[#allocation3 + $0x58] sm:$0xff]
  %v284 = vpack.c.bf16 %v275, %v272
  %v285 = vpack.c.bf16 %v276, %v273
  %v286 = vpack.c.bf16 %v277, %v274
  %v287 = vpack.c.bf16 %v281, %v278
  %v288 = vpack.c.bf16 %v282, %v279
  %v289 = vpack.c.bf16 %v283, %v280
  %v290 = vld [vmem:[%s3] sm:$0xf]
  %v291 = vld [vmem:[%s3 + $0x4] sm:$0xf]
  %v292 = vld [vmem:[%s3 + $0x8] sm:$0xf]
  %v293 = vld [vmem:[%s3 + $0xc] sm:$0xf]
  %v294 = vld [vmem:[%s3 + $0x10] sm:$0xf]
  %v295 = vld [vmem:[%s3 + $0x14] sm:$0xf]
  %v296 = vld [vmem:[%s3 + $0x18] sm:$0xf]
  %v297 = vld [vmem:[%s3 + $0x1c] sm:$0xf]
  %v298 = vld [vmem:[%s3 + $0x20] sm:$0xf]
  %v299 = vld [vmem:[%s3 + $0x24] sm:$0xf]
  %v300 = vld [vmem:[%s3 + $0x28] sm:$0xf]
  %v301 = vld [vmem:[%s3 + $0x2c] sm:$0xf]
  %v302 = vld [vmem:[%s3 + $0x30] sm:$0xf]
  %v303 = vld [vmem:[%s3 + $0x34] sm:$0xf]
  %v304 = vld [vmem:[%s3 + $0x38] sm:$0xf]
  %v305 = vld [vmem:[%s3 + $0x3c] sm:$0xf]
  %v306 = vld [vmem:[%s3 + $0x40] sm:$0xf]
  %v307 = vld [vmem:[%s3 + $0x44] sm:$0xf]
  %v308 = vld [vmem:[%s3 + $0x48] sm:$0xf]
  %v309 = vld [vmem:[%s3 + $0x4c] sm:$0xf]
  %v310 = vld [vmem:[%s3 + $0x50] sm:$0xf]
  %v311 = vld [vmem:[%s3 + $0x54] sm:$0xf]
  %v312 = vld [vmem:[%s3 + $0x58] sm:$0xf]
  %v313 = vld [vmem:[%s3 + $0x5c] sm:$0xf]
  %v314 = vld [vmem:[%s3 + $0x60] sm:$0xf]
  %v315 = vld [vmem:[%s3 + $0x64] sm:$0xf]
  %v316 = vld [vmem:[%s3 + $0x68] sm:$0xf]
  %v317 = vld [vmem:[%s3 + $0x6c] sm:$0xf]
  %v318 = vld [vmem:[%s3 + $0x70] sm:$0xf]
  %v319 = vld [vmem:[%s3 + $0x74] sm:$0xf]
  %v320 = vld [vmem:[%s3 + $0x78] sm:$0xf]
  %v321 = vld [vmem:[%s3 + $0x7c] sm:$0xf]
  %v322 = vld [vmem:[%s3 + $0x80] sm:$0xf]
  %v323 = vld [vmem:[%s3 + $0x84] sm:$0xf]
  %v324 = vld [vmem:[%s3 + $0x88] sm:$0xf]
  %v325 = vld [vmem:[%s3 + $0x8c] sm:$0xf]
  %v326 = vld [vmem:[%s3 + $0x90] sm:$0xf]
  %v327 = vld [vmem:[%s3 + $0x94] sm:$0xf]
  %v328 = vld [vmem:[%s3 + $0x98] sm:$0xf]
  %v329 = vld [vmem:[%s3 + $0x9c] sm:$0xf]
  %v330 = vld [vmem:[%s3 + $0xa0] sm:$0xf]
  %v331 = vld [vmem:[%s3 + $0xa4] sm:$0xf]
  %v332 = vld [vmem:[%s3 + $0xa8] sm:$0xf]
  %v333 = vld [vmem:[%s3 + $0xac] sm:$0xf]
  %v334 = vld [vmem:[%s3 + $0xb0] sm:$0xf]
  %v335 = vld [vmem:[%s3 + $0xb4] sm:$0xf]
  %v336 = vld [vmem:[%s3 + $0xb8] sm:$0xf]
  %v337 = vld [vmem:[%s3 + $0xbc] sm:$0xf]
  %v338 = vld [vmem:[%s4] sm:$0x1]
  %v340 = vlaneseq
  %v341 = vshrl.u32 %v340, 7
  %v342 = vsub.s32 0, %v341
  %v343 = vrot.slane %v338, %v342
  %v393 = vunpack.c.l.b16 %v290
  %v394 = vunpack.c.l.b16 %v291
  %v395 = vunpack.c.l.b16 %v292
  %v396 = vunpack.c.l.b16 %v293
  %v397 = vunpack.c.l.b16 %v294
  %v398 = vunpack.c.l.b16 %v295
  %v399 = vunpack.c.l.b16 %v296
  %v400 = vunpack.c.l.b16 %v297
  %v401 = vunpack.c.l.b16 %v298
  %v402 = vunpack.c.l.b16 %v299
  %v403 = vunpack.c.l.b16 %v300
  %v404 = vunpack.c.l.b16 %v301
  %v405 = vunpack.c.l.b16 %v302
  %v406 = vunpack.c.l.b16 %v303
  %v407 = vunpack.c.l.b16 %v304
  %v408 = vunpack.c.l.b16 %v305
  %v409 = vunpack.c.l.b16 %v306
  %v410 = vunpack.c.l.b16 %v307
  %v411 = vunpack.c.l.b16 %v308
  %v412 = vunpack.c.l.b16 %v309
  %v413 = vunpack.c.l.b16 %v310
  %v414 = vunpack.c.l.b16 %v311
  %v415 = vunpack.c.l.b16 %v312
  %v416 = vunpack.c.l.b16 %v313
  %v417 = vunpack.c.l.b16 %v314
  %v418 = vunpack.c.l.b16 %v315
  %v419 = vunpack.c.l.b16 %v316
  %v420 = vunpack.c.l.b16 %v317
  %v421 = vunpack.c.l.b16 %v318
  %v422 = vunpack.c.l.b16 %v319
  %v423 = vunpack.c.l.b16 %v320
  %v424 = vunpack.c.l.b16 %v321
  %v425 = vunpack.c.l.b16 %v322
  %v426 = vunpack.c.l.b16 %v323
  %v427 = vunpack.c.l.b16 %v324
  %v428 = vunpack.c.l.b16 %v325
  %v429 = vunpack.c.l.b16 %v326
  %v430 = vunpack.c.l.b16 %v327
  %v431 = vunpack.c.l.b16 %v328
  %v432 = vunpack.c.l.b16 %v329
  %v433 = vunpack.c.l.b16 %v330
  %v434 = vunpack.c.l.b16 %v331
  %v435 = vunpack.c.l.b16 %v332
  %v436 = vunpack.c.l.b16 %v333
  %v437 = vunpack.c.l.b16 %v334
  %v438 = vunpack.c.l.b16 %v335
  %v439 = vunpack.c.l.b16 %v336
  %v440 = vunpack.c.l.b16 %v337
  %v441 = vpack.c.b16 %v394, %v393
  %v442 = vpack.c.b16 %v396, %v395
  %v443 = vpack.c.b16 %v398, %v397
  %v444 = vpack.c.b16 %v400, %v399
  %v445 = vpack.c.b16 %v402, %v401
  %v446 = vpack.c.b16 %v404, %v403
  %v447 = vpack.c.b16 %v406, %v405
  %v448 = vpack.c.b16 %v408, %v407
  %v449 = vpack.c.b16 %v410, %v409
  %v450 = vpack.c.b16 %v412, %v411
  %v451 = vpack.c.b16 %v414, %v413
  %v452 = vpack.c.b16 %v416, %v415
  %v453 = vpack.c.b16 %v418, %v417
  %v454 = vpack.c.b16 %v420, %v419
  %v455 = vpack.c.b16 %v422, %v421
  %v456 = vpack.c.b16 %v424, %v423
  %v457 = vpack.c.b16 %v426, %v425
  %v458 = vpack.c.b16 %v428, %v427
  %v459 = vpack.c.b16 %v430, %v429
  %v460 = vpack.c.b16 %v432, %v431
  %v461 = vpack.c.b16 %v434, %v433
  %v462 = vpack.c.b16 %v436, %v435
  %v463 = vpack.c.b16 %v438, %v437
  %v464 = vpack.c.b16 %v440, %v439
  %489 = vmatprep.subr.bf16.mxu0 0
  %490 = vmatpush1.bf16.msra.mxu0 %v448
  %491 = vmatprep.subr.bf16.mxu0 0
  %492 = vmatpush1.bf16.msra.mxu0 %v447
  %493 = vmatprep.subr.bf16.mxu0 0
  %494 = vmatpush1.bf16.msra.mxu0 %v446
  %495 = vmatprep.subr.bf16.mxu0 0
  %496 = vmatpush1.bf16.msra.mxu0 %v445
  %497 = vmatprep.subr.bf16.mxu0 0
  %498 = vmatpush1.bf16.msra.mxu0 %v444
  %499 = vmatprep.subr.bf16.mxu0 0
  %500 = vmatpush1.bf16.msra.mxu0 %v443
  %501 = vmatprep.subr.bf16.mxu0 0
  %502 = vmatpush1.bf16.msra.mxu0 %v442
  %503 = vmatprep.subr.bf16.mxu0 0
  %504 = vmatpush1.bf16.msra.mxu0 %v441
  %505 = vmatprep.subr.bf16.mxu0 0
  %506 = vmatpush2.bf16.msra.mxu0 %v456
  %507 = vmatprep.subr.bf16.mxu0 0
  %508 = vmatpush2.bf16.msra.mxu0 %v455
  %509 = vmatprep.subr.bf16.mxu0 0
  %510 = vmatpush2.bf16.msra.mxu0 %v454
  %511 = vmatprep.subr.bf16.mxu0 0
  %512 = vmatpush2.bf16.msra.mxu0 %v453
  %513 = vmatprep.subr.bf16.mxu0 0
  %514 = vmatpush2.bf16.msra.mxu0 %v452
  %515 = vmatprep.subr.bf16.mxu0 0
  %516 = vmatpush2.bf16.msra.mxu0 %v451
  %517 = vmatprep.subr.bf16.mxu0 0
  %518 = vmatpush2.bf16.msra.mxu0 %v450
  %519 = vmatprep.subr.bf16.mxu0 0
  %520 = vmatpush2.bf16.msra.mxu0 %v449
  %521 = vmatprep.mubr.bf16.mxu0 %v285
  %522 = vmatmul.mubr.bf16.gmra.mxu0 %v284
  %v523 = vpop.f32.mrf.mxu0
  %v524 = vadd.f32 %v343, %v523
  %v525 = vpop.f32.mrf.mxu0
  %v526 = vpop.f32.mrf.mxu0
  %v527 = vadd.f32 %v343, %v526
  %v528 = vpop.f32.mrf.mxu0
  %529 = vmatprep.mubr.bf16.mxu0 %v288
  %530 = vmatmul.mubr.bf16.gmra.mxu0 %v287
  %v531 = vpop.f32.mrf.mxu0
  %v532 = vadd.f32 %v343, %v531
  %v533 = vpop.f32.mrf.mxu0
  %v534 = vpop.f32.mrf.mxu0
  %v535 = vadd.f32 %v343, %v534
  %v536 = vpop.f32.mrf.mxu0
  %537 = vdwg.mxu0
  %538 = vmatprep.subr.bf16.mxu0 0
  %539 = vmatpush1.bf16.msra.mxu0 %v464
  %540 = vmatprep.subr.bf16.mxu0 0
  %541 = vmatpush1.bf16.msra.mxu0 %v463
  %542 = vmatprep.subr.bf16.mxu0 0
  %543 = vmatpush1.bf16.msra.mxu0 %v462
  %544 = vmatprep.subr.bf16.mxu0 0
  %545 = vmatpush1.bf16.msra.mxu0 %v461
  %546 = vmatprep.subr.bf16.mxu0 0
  %547 = vmatpush1.bf16.msra.mxu0 %v460
  %548 = vmatprep.subr.bf16.mxu0 0
  %549 = vmatpush1.bf16.msra.mxu0 %v459
  %550 = vmatprep.subr.bf16.mxu0 0
  %551 = vmatpush1.bf16.msra.mxu0 %v458
  %552 = vmatprep.subr.bf16.mxu0 0
  %553 = vmatpush1.bf16.msra.mxu0 %v457
  %554 = vmatprep.subr.bf16.mxu0 0
  %555 = vmatpush2.bf16.msra.mxu0 0
  %556 = vmatprep.subr.bf16.mxu0 0
  %557 = vmatpush2.bf16.msra.mxu0 0
  %558 = vmatprep.subr.bf16.mxu0 0
  %559 = vmatpush2.bf16.msra.mxu0 0
  %560 = vmatprep.subr.bf16.mxu0 0
  %561 = vmatpush2.bf16.msra.mxu0 0
  %562 = vmatprep.subr.bf16.mxu0 0
  %563 = vmatpush2.bf16.msra.mxu0 0
  %564 = vmatprep.subr.bf16.mxu0 0
  %565 = vmatpush2.bf16.msra.mxu0 0
  %566 = vmatprep.subr.bf16.mxu0 0
  %567 = vmatpush2.bf16.msra.mxu0 0
  %568 = vmatprep.subr.bf16.mxu0 0
  %569 = vmatpush2.bf16.msra.mxu0 0
  %570 = vmatprep.mubr.bf16.mxu0 0
  %571 = vmatmul.mubr.bf16.gmra.mxu0 %v286
  %v572 = vpop.f32.mrf.mxu0
  %v573 = vadd.f32 %v524, %v572
  %v574 = vpop.f32.mrf.mxu0
  %v575 = vpop.f32.mrf.mxu0
  %v576 = vadd.f32 %v527, %v575
  %v577 = vpop.f32.mrf.mxu0
  %578 = vmatprep.mubr.bf16.mxu0 0
  %579 = vmatmul.mubr.bf16.gmra.mxu0 %v289
  %v580 = vpop.f32.mrf.mxu0
  %v581 = vadd.f32 %v532, %v580
  %v582 = vpop.f32.mrf.mxu0
  %v583 = vpop.f32.mrf.mxu0
  %v584 = vadd.f32 %v535, %v583
  %v585 = vpop.f32.mrf.mxu0
  %586 = vdwg.mxu0
  %587 = vst.msk [vmem:[%s5] sm:$0xff] %vm39, %v573
  %589 = vrot.lane.b32.xlu0 %v576, 64
  %v590 = vpop.permute.xlu0 %589
  %592 = vst.msk [vmem:[%s5] sm:$0xff] %vm37, %v590
  %s593 = scalar_lea.vmem %s5, 8
  %594 = vst.msk [vmem:[%s593] sm:$0xff] %vm39, %v581
  %596 = vrot.lane.b32.xlu0 %v584, 64
  %v597 = vpop.permute.xlu0 %596
  %599 = vst.msk [vmem:[%s593] sm:$0xff] %vm37, %v597
  // Predicated region
  $region22: #{forward.1} parent=0 // pred_check
    _
  $region23: #{forward.1} parent=0 // pred_check_branch
    %601 = sbr.rel (0) target = $region25
  $region24: #{forward.1} parent=0 // pred_region
    _
  $region25: #{forward.1} parent=0 // pred_fallthru
    _
  // Predicated region
  $region26: #{forward.1} parent=0 // pred_check
    _
  $region27: #{forward.1} parent=0 // pred_check_branch
    %603 = sbr.rel (0) target = $region29
  $region28: #{forward.1} parent=0 // pred_region
    _
  $region29: #{forward.1} parent=0 // pred_fallthru
    _

</llo_original>
